<compile_context>
chip_gen: v7x
topology: tpu7x:2x2x1
jax: 0.10.0
libtpu: 0.0.40
codegen_flags: <defaults>
</compile_context>

<pallas_src>
import functools

import jax
import jax.numpy as jnp
from jax.experimental import pallas as pl
from jax.experimental.pallas import tpu as pltpu


def _atm_layernorm_kernel(x_ref, w_ref, b_ref, o_ref, *, eps, inv_d, fp32_cast,
                          affine):
    x = x_ref[...]                                   # (TM, D)
    orig_dtype = x.dtype
    h = x.astype(jnp.float32) if fp32_cast else x
    # One pass over h: row sum and row sum-of-squares, then scale by 1/D.
    s = jnp.sum(h, axis=-1, keepdims=True)
    ss = jnp.sum(h * h, axis=-1, keepdims=True)
    mean = s * inv_d
    variance = ss * inv_d   # mean(x^2): AlexaTM quirk (NOT centered variance)
    h = (h - mean) * jax.lax.rsqrt(variance + eps)   # rsqrt -> EUP slot (free-ish)
    h = h.astype(orig_dtype)
    if affine:
        h = h * w_ref[...] + b_ref[...]              # (1, D) broadcast over rows
    o_ref[...] = h


def _ceil_div(a, b):
    return -(-a // b)


def _pick_row_tile(R, D, dtype, fp32_cast, vmem_budget_bytes=24 << 20):
    """Largest sublane-packed row tile whose pipelined buffers fit the budget."""
    itemsize = jnp.dtype(dtype).itemsize
    # Whole packed vregs: 8 rows for 4-byte, 16 for 2-byte, 32 for 1-byte dtypes.
    sublane = max(8, 32 // itemsize)
    # Per-row VMEM bytes: 2x double-buffered input + 2x double-buffered output
    # + in-kernel temporaries (h and h*h; f32 when casting or already f32).
    temp_bytes = 2 * 4 if (fp32_cast or itemsize == 4) else 2 * itemsize
    per_row = D * (2 * itemsize + 2 * itemsize + temp_bytes)
    tile = max(1, vmem_budget_bytes // per_row)
    # Keep the grid at >= 2 steps when there is enough data (v7x: 2 TCs/chip).
    half_rows = _ceil_div(_ceil_div(R, 2), sublane) * sublane
    tile = min(tile, half_rows, 1024)
    tile = max(sublane, (tile // sublane) * sublane)
    return int(tile)


def alexatm_layernorm(x, weight=None, bias=None, *, eps=1e-5,
                      elementwise_affine=True, fp32_cast_layer_norm=False,
                      row_tile=None, vmem_limit_bytes=48 * 1024 * 1024):
    """x: (..., D). weight, bias: (D,) (ignored if elementwise_affine=False).

    Returns the same shape/dtype as x.
    """
    orig_shape = x.shape
    D = orig_shape[-1]
    x2 = x.reshape(-1, D)
    R = x2.shape[0]

    itemsize = jnp.dtype(x.dtype).itemsize
    sublane = max(8, 32 // itemsize)
    if row_tile is None:
        row_tile = _pick_row_tile(R, D, x.dtype, fp32_cast_layer_norm)
    else:
        # Enforce dtype-aware sublane packing on caller-provided tiles.
        row_tile = max(sublane, (int(row_tile) // sublane) * sublane)

    if elementwise_affine:
        w2 = weight.reshape(1, D).astype(x.dtype)
        b2 = bias.reshape(1, D).astype(x.dtype)
    else:
        w2 = jnp.ones((1, D), x.dtype)
        b2 = jnp.zeros((1, D), x.dtype)

    kernel = functools.partial(
        _atm_layernorm_kernel,
        eps=eps,
        inv_d=1.0 / D,
        fp32_cast=fp32_cast_layer_norm,
        affine=elementwise_affine,
    )

    out = pl.pallas_call(
        kernel,
        out_shape=jax.ShapeDtypeStruct((R, D), x.dtype),
        grid_spec=pltpu.PrefetchScalarGridSpec(
            num_scalar_prefetch=0,
            grid=(pl.cdiv(R, row_tile),),   # partial last block masked on writeback
            in_specs=[
                pl.BlockSpec((row_tile, D), lambda i: (i, 0)),
                pl.BlockSpec((1, D), lambda i: (0, 0)),
                pl.BlockSpec((1, D), lambda i: (0, 0)),
            ],
            out_specs=pl.BlockSpec((row_tile, D), lambda i: (i, 0)),
        ),
        compiler_params=pltpu.CompilerParams(
            dimension_semantics=("parallel",),
            vmem_limit_bytes=vmem_limit_bytes,
        ),
    )(x2, w2, b2)

    return out.reshape(orig_shape)


def _reference(x, weight, bias, eps=1e-5, elementwise_affine=True,
               fp32_cast_layer_norm=False):
    orig_dtype = x.dtype
    h = x.astype(jnp.float32) if fp32_cast_layer_norm else x
    variance = jnp.mean(h * h, axis=-1, keepdims=True)
    mean = jnp.mean(h, axis=-1, keepdims=True)
    h = (h - mean) * jax.lax.rsqrt(variance + eps)
    h = h.astype(orig_dtype)
    if elementwise_affine:
        h = h * weight.astype(orig_dtype) + bias.astype(orig_dtype)
    return h


if __name__ == "__main__":
    key = jax.random.PRNGKey(0)
    kx1, kx2, kx3, kw, kb = jax.random.split(key, 5)

    # Test 1: small f32, tile-aligned rows (B=2, S=8, D=128).
    B, S, D = 2, 8, 128
    x = jax.random.normal(kx1, (B, S, D), dtype=jnp.float32)
    weight = jnp.ones((D,), jnp.float32) + 0.01 * jax.random.normal(kw, (D,), jnp.float32)
    bias = jnp.zeros((D,), jnp.float32) + 0.01 * jax.random.normal(kb, (D,), jnp.float32)
    out = jax.block_until_ready(alexatm_layernorm(x, weight, bias))
    ref = _reference(x, weight, bias)
    assert out.shape == x.shape and out.dtype == x.dtype
    assert jnp.allclose(out, ref, atol=1e-5, rtol=1e-5), \
        f"f32 aligned: max err {jnp.max(jnp.abs(out - ref))}"

    # Test 2: f32 with rows NOT a multiple of the row tile (exercises the
    # partial last grid block / masked writeback), D=256.
    B2, S2, D2 = 2, 9, 256
    x2 = jax.random.normal(kx2, (B2, S2, D2), dtype=jnp.float32)
    w2 = jnp.ones((D2,), jnp.float32)
    b2 = 0.05 * jnp.arange(D2, dtype=jnp.float32)
    out2 = jax.block_until_ready(alexatm_layernorm(x2, w2, b2))
    ref2 = _reference(x2, w2, b2)
    assert jnp.allclose(out2, ref2, atol=1e-5, rtol=1e-5), \
        f"f32 ragged: max err {jnp.max(jnp.abs(out2 - ref2))}"

    # Test 3: bf16 input with fp32_cast_layer_norm=True (f32 stats, bf16 out).
    x3 = jax.random.normal(kx3, (B, S, D), dtype=jnp.float32).astype(jnp.bfloat16)
    out3 = jax.block_until_ready(
        alexatm_layernorm(x3, weight, bias, fp32_cast_layer_norm=True))
    ref3 = _reference(x3, weight, bias, fp32_cast_layer_norm=True)
    assert out3.dtype == jnp.bfloat16
    assert jnp.allclose(out3.astype(jnp.float32), ref3.astype(jnp.float32),
                        atol=2e-2, rtol=2e-2), \
        f"bf16 cast: max err {jnp.max(jnp.abs(out3.astype(jnp.float32) - ref3.astype(jnp.float32)))}"

    print("KERNEL_OK")
</pallas_src>

<mosaic_0001>
module attributes {stable_mosaic.version = 11 : i64} {
  func.func @_atm_layernorm_kernel(%arg0: i32, %arg1: memref<8x128xf32, #tpu.memory_space<vmem>>, %arg2: memref<1x128xf32, #tpu.memory_space<vmem>>, %arg3: memref<1x128xf32, #tpu.memory_space<vmem>>, %arg4: memref<8x128xf32, #tpu.memory_space<vmem>>) attributes {dimension_semantics = [#tpu.dimension_semantics<parallel>], iteration_bounds = array<i64: 2>, scalar_prefetch = 0 : i64, scratch_operands = 0 : i64, tpu.core_type = #tpu.core_type<tc>, window_params = [{transform_indices = @transform_0, window_bounds = array<i64: 8, 128>}, {pipeline_mode = #tpu.pipeline_mode<synchronous>, transform_indices = @transform_1, window_bounds = array<i64: 1, 128>}, {pipeline_mode = #tpu.pipeline_mode<synchronous>, transform_indices = @transform_2, window_bounds = array<i64: 1, 128>}, {transform_indices = @transform_3, window_bounds = array<i64: 8, 128>}]} {
    %c0 = arith.constant 0 : index
    %c0_0 = arith.constant 0 : index
    %0 = vector.load %arg1[%c0, %c0_0] : memref<8x128xf32, #tpu.memory_space<vmem>>, vector<8x128xf32>
    %cst = arith.constant dense<0.000000e+00> : vector<8xf32>
    %1 = vector.multi_reduction <add>, %0, %cst [1] : vector<8x128xf32> to vector<8xf32>
    %2 = vector.shape_cast %1 : vector<8xf32> to vector<8x1xf32>
    %3 = arith.mulf %0, %0 : vector<8x128xf32>
    %cst_1 = arith.constant dense<0.000000e+00> : vector<8xf32>
    %4 = vector.multi_reduction <add>, %3, %cst_1 [1] : vector<8x128xf32> to vector<8xf32>
    %5 = vector.shape_cast %4 : vector<8xf32> to vector<8x1xf32>
    %cst_2 = arith.constant 7.812500e-03 : f32
    %6 = vector.broadcast %cst_2 : f32 to vector<8x1xf32>
    %7 = arith.mulf %2, %6 : vector<8x1xf32>
    %cst_3 = arith.constant 7.812500e-03 : f32
    %8 = vector.broadcast %cst_3 : f32 to vector<8x1xf32>
    %9 = arith.mulf %5, %8 : vector<8x1xf32>
    %10 = vector.broadcast %7 : vector<8x1xf32> to vector<8x128xf32>
    %11 = arith.subf %0, %10 : vector<8x128xf32>
    %cst_4 = arith.constant 9.99999974E-6 : f32
    %12 = vector.broadcast %cst_4 : f32 to vector<8x1xf32>
    %13 = arith.addf %9, %12 : vector<8x1xf32>
    %14 = math.rsqrt %13 : vector<8x1xf32>
    %15 = vector.broadcast %14 : vector<8x1xf32> to vector<8x128xf32>
    %16 = arith.mulf %11, %15 : vector<8x128xf32>
    %c0_5 = arith.constant 0 : index
    %c0_6 = arith.constant 0 : index
    %17 = vector.load %arg2[%c0_5, %c0_6] : memref<1x128xf32, #tpu.memory_space<vmem>>, vector<1x128xf32>
    %18 = vector.broadcast %17 : vector<1x128xf32> to vector<8x128xf32>
    %19 = arith.mulf %16, %18 : vector<8x128xf32>
    %c0_7 = arith.constant 0 : index
    %c0_8 = arith.constant 0 : index
    %20 = vector.load %arg3[%c0_7, %c0_8] : memref<1x128xf32, #tpu.memory_space<vmem>>, vector<1x128xf32>
    %21 = vector.broadcast %20 : vector<1x128xf32> to vector<8x128xf32>
    %22 = arith.addf %19, %21 : vector<8x128xf32>
    %c0_9 = arith.constant 0 : index
    %c0_10 = arith.constant 0 : index
    %23 = vector.load %arg4[%c0_9, %c0_10] : memref<8x128xf32, #tpu.memory_space<vmem>>, vector<8x128xf32>
    tpu.vector_store %arg4[%c0_9, %c0_10], %22 {strides = array<i32>} : memref<8x128xf32, #tpu.memory_space<vmem>>, vector<8x128xf32>,
    return
  }
  func.func @transform_0(%arg0: i32) -> (i32, i32) {
    %c0_i32 = arith.constant 0 : i32
    %c0_i32_0 = arith.constant 0 : i32
    return %arg0, %c0_i32 : i32, i32
  }
  func.func @transform_1(%arg0: i32) -> (i32, i32) {
    %c0_i32 = arith.constant 0 : i32
    %c0_i32_0 = arith.constant 0 : i32
    %c0_i32_1 = arith.constant 0 : i32
    return %c0_i32, %c0_i32_0 : i32, i32
  }
  func.func @transform_2(%arg0: i32) -> (i32, i32) {
    %c0_i32 = arith.constant 0 : i32
    %c0_i32_0 = arith.constant 0 : i32
    %c0_i32_1 = arith.constant 0 : i32
    return %c0_i32, %c0_i32_0 : i32, i32
  }
  func.func @transform_3(%arg0: i32) -> (i32, i32) {
    %c0_i32 = arith.constant 0 : i32
    %c0_i32_0 = arith.constant 0 : i32
    return %arg0, %c0_i32 : i32, i32
  }
}

</mosaic_0001>

<llo_original>
// kernel: tpu_custom_call.1
$region0: #{tpu_custom_call.1}
  #allocation0 [shape = 'u32[]', space=smem, size = 0x4, offset = 0x4, fixed_abs, tag = 'smem constant byte address 0x4 - core index']
  #allocation1 [shape = 'u32[144,128]{1,0:T(1,128)}', space=vmem, size = 0x12000, scoped, tag = 'internal scratch']
  %s0 = inlined_call_operand.hbm [shape: f32[16,128], index: 0, kind: input, shape index: {}]
  %s1 = inlined_call_operand.vmem [shape: f32[1,128], index: 1, kind: input, shape index: {}]
  %s2 = inlined_call_operand.vmem [shape: f32[1,128], index: 2, kind: input, shape index: {}]
  %s3 = inlined_call_operand.hbm [shape: f32[16,128], index: 3, kind: output, shape index: {}]
  %s4 = sld [smem:[#allocation0]]
  $region49: #{tpu_custom_call.1} parent=0
    _
  %s6 = ssub.s32 1, %s4
  %s7 = scalar_select 0, %s6, %s4
  $region1: #{tpu_custom_call.1} parent=0
    #allocation2 [shape = 'u8[8192]{0}', space=vmem, size = 0x2000, scoped, tag = 'input window, operand 0']
    #allocation3 [shape = 's32[2]{0}', space=sflag, size = 0x8, scoped, tag = 'scoped memory for tpu_custom_call.1']
    #allocation4 [shape = 's32[2]{0}', space=sflag, size = 0x8, scoped, tag = 'scoped memory for tpu_custom_call.1']
    #allocation5 [shape = 'u8[8192]{0}', space=vmem, size = 0x2000, scoped, tag = 'output window, operand 0']
    %8 = vsyncpa [#allocation3], 0
    %s9 = scalar_lea.sflag [#allocation3], 1
    %10 = vsyncpa %s9, 0
    %11 = vsyncpa [#allocation4], 0
    %s12 = scalar_lea.sflag [#allocation4], 1
    %13 = vsyncpa %s12, 0
    loop: start=0, step=1, limit=4
    $region2: #{tpu_custom_call.1} parent=1 // loop_pre_header
      _
    $region3: #{tpu_custom_call.1} parent=1 // loop_header
      %s15 = sphi 0, %s19
      %p16 = scmp.ge.s32.totalorder %s15, 4
      %s25 = sphi 0, %s27
      %s28 = sphi 0, %s25
      %s29 = sphi 0, %s28
      %s45 = sphi 0, %s29
      %s49 = sphi 0, %s49
      %s51 = sphi 0, %s49
      %s52 = sphi 0, %s51
      %s66 = sphi 0, %s52
      %s70 = sphi 0, %s70
      %s72 = sphi 0, %s70
      %s73 = sphi 0, %s72
      %s87 = sphi 0, %s73
      %s93 = sphi 0, %s95
      %s96 = sphi 0, %s93
      %s97 = sphi 0, %s96
      %s113 = sphi 0, %s97
    $region4: #{tpu_custom_call.1} parent=1 // loop_header_branch
      %18 = sbr.rel (%p16) target = $region8
    $region5: #{tpu_custom_call.1} parent=1 // loop_body
      %s20 = ssub.s32 %s15, 1
      %s21 = ssub.s32 %s15, 2
      %s22 = sadd.s32 %s15, 1
      %s23 = ssub.s32 %s15, %s22
      %p24 = scmp.eq.s32.totalorder %s23, 0
      %s26 = sadd.s32 %s25, 1
      %s27 = scalar_select %p24, %s25, %s26
      %p30 = pneg %p24
      %p31 = scmp.eq.s32.totalorder %s15, 1
      %p32 = por %p30, %p31
      %p33 = scmp.ne.s32.totalorder %s25, %s28
      %p34 = scmp.eq.s32.totalorder %s15, 0
      %p35 = por %p33, %p34
      %p36 = scmp.ne.s32.totalorder %s25, %s28
      %p37 = scmp.eq.s32.totalorder %s20, 1
      %p38 = por %p36, %p37
      %p39 = scmp.ne.s32.totalorder %s28, %s29
      %p40 = scmp.eq.s32.totalorder %s20, 0
      %p41 = por %p39, %p40
      %p42 = scmp.ne.s32.totalorder %s28, %s29
      %p43 = scmp.eq.s32.totalorder %s21, 1
      %p44 = por %p42, %p43
      %p46 = scmp.ne.s32.totalorder %s29, %s45
      %p47 = scmp.eq.s32.totalorder %s21, 0
      %p48 = por %p46, %p47
      %s50 = sadd.s32 %s49, 1
      %p53 = scmp.eq.s32.totalorder %s15, 1
      %p54 = scmp.ne.s32.totalorder %s49, %s51
      %p55 = scmp.eq.s32.totalorder %s15, 0
      %p56 = por %p54, %p55
      %p57 = scmp.ne.s32.totalorder %s49, %s51
      %p58 = scmp.eq.s32.totalorder %s20, 1
      %p59 = por %p57, %p58
      %p60 = scmp.ne.s32.totalorder %s51, %s52
      %p61 = scmp.eq.s32.totalorder %s20, 0
      %p62 = por %p60, %p61
      %p63 = scmp.ne.s32.totalorder %s51, %s52
      %p64 = scmp.eq.s32.totalorder %s21, 1
      %p65 = por %p63, %p64
      %p67 = scmp.ne.s32.totalorder %s52, %s66
      %p68 = scmp.eq.s32.totalorder %s21, 0
      %p69 = por %p67, %p68
      %s71 = sadd.s32 %s70, 1
      %p74 = scmp.eq.s32.totalorder %s15, 1
      %p75 = scmp.ne.s32.totalorder %s70, %s72
      %p76 = scmp.eq.s32.totalorder %s15, 0
      %p77 = por %p75, %p76
      %p78 = scmp.ne.s32.totalorder %s70, %s72
      %p79 = scmp.eq.s32.totalorder %s20, 1
      %p80 = por %p78, %p79
      %p81 = scmp.ne.s32.totalorder %s72, %s73
      %p82 = scmp.eq.s32.totalorder %s20, 0
      %p83 = por %p81, %p82
      %p84 = scmp.ne.s32.totalorder %s72, %s73
      %p85 = scmp.eq.s32.totalorder %s21, 1
      %p86 = por %p84, %p85
      %p88 = scmp.ne.s32.totalorder %s73, %s87
      %p89 = scmp.eq.s32.totalorder %s21, 0
      %p90 = por %p88, %p89
      %s91 = ssub.s32 %s15, %s22
      %p92 = scmp.eq.s32.totalorder %s91, 0
      %s94 = sadd.s32 %s93, 1
      %s95 = scalar_select %p92, %s93, %s94
      %p98 = pneg %p92
      %p99 = scmp.eq.s32.totalorder %s15, 1
      %p100 = por %p98, %p99
      %p101 = scmp.ne.s32.totalorder %s93, %s96
      %p102 = scmp.eq.s32.totalorder %s15, 0
      %p103 = por %p101, %p102
      %p104 = scmp.ne.s32.totalorder %s93, %s96
      %p105 = scmp.eq.s32.totalorder %s20, 1
      %p106 = por %p104, %p105
      %p107 = scmp.ne.s32.totalorder %s96, %s97
      %p108 = scmp.eq.s32.totalorder %s20, 0
      %p109 = por %p107, %p108
      %p110 = scmp.ne.s32.totalorder %s96, %s97
      %p111 = scmp.eq.s32.totalorder %s21, 1
      %p112 = por %p110, %p111
      %p114 = scmp.ne.s32.totalorder %s97, %s113
      %p115 = scmp.eq.s32.totalorder %s21, 0
      %p116 = por %p114, %p115
      %p117 = scmp.le.s32.totalorder 1, %s15
      %p118 = scmp.lt.s32.totalorder %s15, 3
      %p119 = pnand %p117, %p118
      %p120 = pneg %p119
      // Predicated region
      $region9: #{tpu_custom_call.1} parent=5 // pred_check
        _
      $region10: #{tpu_custom_call.1} parent=5 // pred_check_branch
        %122 = sbr.rel (%p119) target = $region12
      $region11: #{tpu_custom_call.1} parent=5 // pred_region
        %s123 = ssub.s32 %s15, 1
        // Predicated region
        $region13: #{tpu_custom_call.1} parent=11 // pred_check
          %p124 = pneg %p62
        $region14: #{tpu_custom_call.1} parent=11 // pred_check_branch
          %126 = sbr.rel (%p124) target = $region16
        $region15: #{tpu_custom_call.1} parent=11 // pred_region
          _
        $region16: #{tpu_custom_call.1} parent=11 // pred_fallthru
          _
        // Predicated region
        $region17: #{tpu_custom_call.1} parent=11 // pred_check
          %p127 = pneg %p83
        $region18: #{tpu_custom_call.1} parent=11 // pred_check_branch
          %129 = sbr.rel (%p127) target = $region20
        $region19: #{tpu_custom_call.1} parent=11 // pred_region
          _
        $region20: #{tpu_custom_call.1} parent=11 // pred_fallthru
          _
      $region12: #{tpu_custom_call.1} parent=5 // pred_fallthru
        _
      %p130 = scmp.lt.s32.totalorder %s15, 2
      // Predicated region
      $region21: #{tpu_custom_call.1} parent=5 // pred_check
        %p131 = pneg %p130
      $region22: #{tpu_custom_call.1} parent=5 // pred_check_branch
        %133 = sbr.rel (%p131) target = $region24
      $region23: #{tpu_custom_call.1} parent=5 // pred_region
        // Predicated region
        $region25: #{tpu_custom_call.1} parent=23 // pred_check
          %p134 = pneg %p35
        $region26: #{tpu_custom_call.1} parent=23 // pred_check_branch
          %136 = sbr.rel (%p134) target = $region28
        $region27: #{tpu_custom_call.1} parent=23 // pred_region
          %s137 = sand.u32 %s25, 1
          %s138 = scalar_lea.sflag [#allocation3], %s137
          %s139 = sand.u32 %s25, 1
          %s140 = smul.addr %s139, 8
          %s141 = scalar_lea.vmem [#allocation2], %s140
          %s143 = ssub.s32 128, 128
          %144 = vsyncadd %s138, %s143
          %s145 = smul.addr %s15, 128
          %s146 = scalar_lea.hbm %s0, %s145
          %s148 = sshll.u32 %s141, 4
          %s149 = int_to_ptr.vmem [resolvable:$true] %s148
          %151 = dma.hbm_to_vmem [thread:$0]  %s146, 128, %s149, %s138
        $region28: #{tpu_custom_call.1} parent=23 // pred_fallthru
          _
      $region24: #{tpu_custom_call.1} parent=5 // pred_fallthru
        _
      %p152 = scmp.le.s32.totalorder 1, %s15
      %p153 = scmp.lt.s32.totalorder %s15, 3
      %p154 = pnand %p152, %p153
      %p155 = pneg %p154
      // Predicated region
      $region29: #{tpu_custom_call.1} parent=5 // pred_check
        _
      $region30: #{tpu_custom_call.1} parent=5 // pred_check_branch
        %157 = sbr.rel (%p154) target = $region32
      $region31: #{tpu_custom_call.1} parent=5 // pred_region
        %s158 = ssub.s32 %s15, 1
        %s159 = sand.u32 %s28, 1
        %s160 = scalar_lea.sflag [#allocation3], %s159
        %s161 = sand.u32 %s28, 1
        %s162 = smul.addr %s161, 8
        %s163 = scalar_lea.vmem [#allocation2], %s162
        // Predicated region
        $region33: #{tpu_custom_call.1} parent=31 // pred_check
          %p164 = pneg %p41
        $region34: #{tpu_custom_call.1} parent=31 // pred_check_branch
          %166 = sbr.rel (%p164) target = $region36
        $region35: #{tpu_custom_call.1} parent=31 // pred_region
          %167 = dma.done %s160, 128
        $region36: #{tpu_custom_call.1} parent=31 // pred_fallthru
          _
        %s168 = sand.u32 %s28, 1
        %s169 = scalar_lea.sflag [#allocation3], %s168
        %s170 = sand.u32 %s28, 1
        %s171 = smul.addr %s170, 8
        %s172 = scalar_lea.vmem [#allocation2], %s171
        %p173 = pneg %p41
        %p174 = pneg %p38
        %p175 = pneg %p62
        %p176 = pneg %p59
        %p177 = pneg %p83
        %p178 = pneg %p80
        %p179 = pneg %p109
        %p180 = pneg %p106
        %s181 = sand.u32 %s96, 1
        %s182 = scalar_lea.sflag [#allocation4], %s181
        %s183 = sand.u32 %s96, 1
        %s184 = smul.addr %s183, 8
        %s185 = scalar_lea.vmem [#allocation5], %s184
        %v186 = vld [vmem:[%s163] sm:$0xff]
        %187 = vadd.xlane.f32.xlu0 %v186
        %v188 = vpop.xlane.xlu0 %187
        %v189 = vmul.f32 %v186, %v186
        %190 = vadd.xlane.f32.xlu0 %v189
        %v191 = vpop.xlane.xlu0 %190
        %v192 = vmul.f32 %v188, 0.0078125
        %v193 = vmul.f32 %v191, 0.0078125
        %v194 = vsub.f32 %v186, %v192
        %v195 = vadd.f32 %v193, 1e-05
        %v196 = vrsqrt.pop %v195
        %v197 = vmul.f32 %v194, %v196
        %v198 = vld [vmem:[%s1] sm:$0x1]
        %v200 = vlaneseq
        %v201 = vshrl.u32 %v200, 7
        %v202 = vsub.s32 0, %v201
        %v203 = vrot.slane %v198, %v202
        %v205 = vmul.f32 %v197, %v203
        %v206 = vld [vmem:[%s2] sm:$0x1]
        %v208 = vlaneseq
        %v209 = vshrl.u32 %v208, 7
        %v210 = vsub.s32 0, %v209
        %v211 = vrot.slane %v206, %v210
        %v213 = vadd.f32 %v205, %v211
        %214 = vst [vmem:[%s185] sm:$0xff] %v213
        %s215 = sand.u32 %s96, 1
        %s216 = scalar_lea.sflag [#allocation4], %s215
        %s217 = sand.u32 %s96, 1
        %s218 = smul.addr %s217, 8
        %s219 = scalar_lea.vmem [#allocation5], %s218
        // Predicated region
        $region37: #{tpu_custom_call.1} parent=31 // pred_check
          %p220 = pneg %p106
        $region38: #{tpu_custom_call.1} parent=31 // pred_check_branch
          %222 = sbr.rel (%p220) target = $region40
        $region39: #{tpu_custom_call.1} parent=31 // pred_region
          %s224 = ssub.s32 128, 128
          %225 = vsyncadd %s216, %s224
          %s226 = smul.addr %s20, 128
          %s227 = scalar_lea.hbm %s3, %s226
          %s229 = sshll.u32 %s219, 4
          %s230 = int_to_ptr.vmem [resolvable:$true] %s229
          %232 = dma.vmem_to_hbm [thread:$0]  %s230, 128, %s227, %s216
        $region40: #{tpu_custom_call.1} parent=31 // pred_fallthru
          _
      $region32: #{tpu_custom_call.1} parent=5 // pred_fallthru
        _
      %p233 = scmp.le.s32.totalorder 2, %s15
      // Predicated region
      $region41: #{tpu_custom_call.1} parent=5 // pred_check
        %p234 = pneg %p233
      $region42: #{tpu_custom_call.1} parent=5 // pred_check_branch
        %236 = sbr.rel (%p234) target = $region44
      $region43: #{tpu_custom_call.1} parent=5 // pred_region
        %s237 = ssub.s32 %s15, 2
        // Predicated region
        $region45: #{tpu_custom_call.1} parent=43 // pred_check
          %p238 = pneg %p112
        $region46: #{tpu_custom_call.1} parent=43 // pred_check_branch
          %240 = sbr.rel (%p238) target = $region48
        $region47: #{tpu_custom_call.1} parent=43 // pred_region
          %s241 = sand.u32 %s97, 1
          %s242 = scalar_lea.sflag [#allocation4], %s241
          %s243 = sand.u32 %s97, 1
          %s244 = smul.addr %s243, 8
          %s245 = scalar_lea.vmem [#allocation5], %s244
          %246 = dma.done %s242, 128
        $region48: #{tpu_custom_call.1} parent=43 // pred_fallthru
          _
      $region44: #{tpu_custom_call.1} parent=5 // pred_fallthru
        _
    $region6: #{tpu_custom_call.1} parent=1 // loop_footer
      %s19 = sadd.s32 1, %s15
    $region7: #{tpu_custom_call.1} parent=1 // loop_footer_branch
      %14 = sbr.rel target = $region3
    $region8: #{tpu_custom_call.1} parent=1 // loop_exit
      _
    %247 = vsyncpa [#allocation3], 1
    %s248 = scalar_lea.sflag [#allocation3], 1
    %249 = vsyncpa %s248, 1
    %250 = vsyncpa [#allocation4], 1
    %s251 = scalar_lea.sflag [#allocation4], 1
    %252 = vsyncpa %s251, 1

</llo_original>
